<compile_context>
chip_gen: v5e
topology: v5e:2x2
jax: 0.10.0
libtpu: 0.0.40
codegen_flags: <defaults>
</compile_context>

<pallas_src>
import jax
import jax.numpy as jnp
from jax.experimental import pallas as pl
from jax.experimental.pallas import tpu as pltpu

NEG_SLOPE = 0.01  # nn.LeakyReLU() default


def _leaky_relu(x):
    # Equivalent to where(x > 0, x, slope*x) for slope < 1; one fewer VALU op.
    return jnp.maximum(x, NEG_SLOPE * x)


def _round_up(n, m):
    return ((n + m - 1) // m) * m


def mlp_kernel(x_ref, w1_ref, b1_ref, w2_ref, b2_ref, w3_ref, b3_ref, o_ref):
    # One batch tile per grid step: 3 MXU matmuls + VPU leaky-relu, all in VMEM.
    x = x_ref[...]
    h1 = _leaky_relu(
        jnp.dot(x, w1_ref[...], preferred_element_type=jnp.float32) + b1_ref[...]
    )
    h2 = _leaky_relu(
        jnp.dot(h1, w2_ref[...], preferred_element_type=jnp.float32) + b2_ref[...]
    )
    out = jnp.dot(h2, w3_ref[...], preferred_element_type=jnp.float32) + b3_ref[...]
    o_ref[...] = out.astype(o_ref.dtype)


def deep_leaky_relu_forward(x, params, *, tm_max=1024):
    """x: (B, input_neurons) float32.
    params: W transposed to (in, out), b reshaped to (1, out).
    Returns (B, output_neurons) float32."""
    B, F = x.shape
    w1, b1 = params["w1"], params["b1"]
    w2, b2 = params["w2"], params["b2"]
    w3, b3 = params["w3"], params["b3"]
    out_n = w3.shape[1]

    # Batch tile: multiple of 8 sublanes, capped at tm_max. Aim for >=2 grid
    # steps when B is large enough so v7x can shard batch tiles over both TCs.
    TM = min(tm_max, _round_up(max(pl.cdiv(B, 2), 1), 8))
    grid = (pl.cdiv(B, TM),)  # partial last block handled by Pallas (rows indep.)

    # Weights/biases: full-array blocks, constant index_map -> VMEM-resident
    # across all grid steps.
    const = lambda a: pl.BlockSpec(a.shape, lambda i: (0,) * a.ndim)

    out = pl.pallas_call(
        mlp_kernel,
        out_shape=jax.ShapeDtypeStruct((B, out_n), jnp.float32),
        grid=grid,
        in_specs=[
            pl.BlockSpec((TM, F), lambda i: (i, 0)),  # x: tiled over batch
            const(w1), const(b1),
            const(w2), const(b2),
            const(w3), const(b3),
        ],
        # out_n equals the full last dim -> legal block, no lane padding,
        # no wrapper slice pass.
        out_specs=pl.BlockSpec((TM, out_n), lambda i: (i, 0)),
        compiler_params=pltpu.CompilerParams(
            dimension_semantics=("parallel",),  # shard batch tiles over TCs on v7x
        ),
    )(x, w1, b1, w2, b2, w3, b3)

    return out


def init_params(key, input_neurons, output_neurons):
    """Deterministic init mimicking PyTorch nn.Linear default:
    U(-1/sqrt(fan_in), 1/sqrt(fan_in)) for both weight and bias."""
    def linear(key, fan_in, fan_out):
        kw, kb = jax.random.split(key)
        bound = 1.0 / jnp.sqrt(fan_in)
        # PyTorch weight is (out, in); we store transposed (in, out).
        w = jax.random.uniform(kw, (fan_in, fan_out), jnp.float32, -bound, bound)
        b = jax.random.uniform(kb, (1, fan_out), jnp.float32, -bound, bound)
        return w, b

    k1, k2, k3 = jax.random.split(key, 3)
    w1, b1 = linear(k1, input_neurons, input_neurons * 2)
    w2, b2 = linear(k2, input_neurons * 2, input_neurons)
    w3, b3 = linear(k3, input_neurons, output_neurons)
    return {"w1": w1, "b1": b1, "w2": w2, "b2": b2, "w3": w3, "b3": b3}


def reference_forward(x, params):
    h = jnp.dot(x, params["w1"]) + params["b1"]
    h = jnp.where(h > 0, h, NEG_SLOPE * h)
    h = jnp.dot(h, params["w2"]) + params["b2"]
    h = jnp.where(h > 0, h, NEG_SLOPE * h)
    return jnp.dot(h, params["w3"]) + params["b3"]


if __name__ == "__main__":
    input_neurons = 32
    output_neurons = 8

    key = jax.random.PRNGKey(0)
    kx, kp, kx2 = jax.random.split(key, 3)
    params = init_params(kp, input_neurons, output_neurons)

    # Small case: single 8-row tile, partial block (B=4 < TM=8).
    batch = 4
    x = jax.random.normal(kx, (batch, input_neurons), jnp.float32)
    out = jax.block_until_ready(deep_leaky_relu_forward(x, params))
    ref = jax.block_until_ready(reference_forward(x, params))
    assert out.shape == (batch, output_neurons)
    assert jnp.allclose(out, ref, atol=1e-5, rtol=1e-5), "mismatch vs reference (B=4)"

    # Larger case: two grid steps (v7x dual-TC path) with a partial last block.
    batch2 = 300
    x2 = jax.random.normal(kx2, (batch2, input_neurons), jnp.float32)
    out2 = jax.block_until_ready(deep_leaky_relu_forward(x2, params))
    ref2 = jax.block_until_ready(reference_forward(x2, params))
    assert out2.shape == (batch2, output_neurons)
    assert jnp.allclose(out2, ref2, atol=1e-5, rtol=1e-5), "mismatch vs reference (B=300)"

    print("KERNEL_OK")
</pallas_src>

<mosaic_0001>
module attributes {stable_mosaic.version = 11 : i64} {
  func.func @mlp_kernel(%arg0: i32, %arg1: memref<8x32xf32, #tpu.memory_space<vmem>>, %arg2: memref<32x64xf32, #tpu.memory_space<vmem>>, %arg3: memref<1x64xf32, #tpu.memory_space<vmem>>, %arg4: memref<64x32xf32, #tpu.memory_space<vmem>>, %arg5: memref<1x32xf32, #tpu.memory_space<vmem>>, %arg6: memref<32x8xf32, #tpu.memory_space<vmem>>, %arg7: memref<1x8xf32, #tpu.memory_space<vmem>>, %arg8: memref<8x8xf32, #tpu.memory_space<vmem>>) attributes {dimension_semantics = [#tpu.dimension_semantics<parallel>], iteration_bounds = array<i64: 1>, scalar_prefetch = 0 : i64, scratch_operands = 0 : i64, tpu.core_type = #tpu.core_type<tc>, window_params = [{transform_indices = @transform_0, window_bounds = array<i64: 8, 32>}, {pipeline_mode = #tpu.pipeline_mode<synchronous>, transform_indices = @transform_1, window_bounds = array<i64: 32, 64>}, {pipeline_mode = #tpu.pipeline_mode<synchronous>, transform_indices = @transform_2, window_bounds = array<i64: 1, 64>}, {pipeline_mode = #tpu.pipeline_mode<synchronous>, transform_indices = @transform_3, window_bounds = array<i64: 64, 32>}, {pipeline_mode = #tpu.pipeline_mode<synchronous>, transform_indices = @transform_4, window_bounds = array<i64: 1, 32>}, {pipeline_mode = #tpu.pipeline_mode<synchronous>, transform_indices = @transform_5, window_bounds = array<i64: 32, 8>}, {pipeline_mode = #tpu.pipeline_mode<synchronous>, transform_indices = @transform_6, window_bounds = array<i64: 1, 8>}, {transform_indices = @transform_7, window_bounds = array<i64: 8, 8>}]} {
    %c0 = arith.constant 0 : index
    %c0_0 = arith.constant 0 : index
    %0 = vector.load %arg1[%c0, %c0_0] : memref<8x32xf32, #tpu.memory_space<vmem>>, vector<8x32xf32>
    %c0_1 = arith.constant 0 : index
    %c0_2 = arith.constant 0 : index
    %1 = vector.load %arg2[%c0_1, %c0_2] : memref<32x64xf32, #tpu.memory_space<vmem>>, vector<32x64xf32>
    %cst = arith.constant dense<0.000000e+00> : vector<8x64xf32>
    %2 = tpu.matmul %0, %1, %cst {dimension_numbers = #tpu.dot_dimension_numbers<[1], [0], [0], [1], [0, 0, 1, 1], [], []>} : vector<8x32xf32>, vector<32x64xf32>, vector<8x64xf32> -> vector<8x64xf32>
    %c0_3 = arith.constant 0 : index
    %c0_4 = arith.constant 0 : index
    %3 = vector.load %arg3[%c0_3, %c0_4] : memref<1x64xf32, #tpu.memory_space<vmem>>, vector<1x64xf32>
    %4 = vector.broadcast %3 : vector<1x64xf32> to vector<8x64xf32>
    %5 = arith.addf %2, %4 : vector<8x64xf32>
    %cst_5 = arith.constant 0.00999999977 : f32
    %6 = vector.broadcast %cst_5 : f32 to vector<8x64xf32>
    %7 = arith.mulf %6, %5 : vector<8x64xf32>
    %8 = arith.maximumf %5, %7 : vector<8x64xf32>
    %c0_6 = arith.constant 0 : index
    %c0_7 = arith.constant 0 : index
    %9 = vector.load %arg4[%c0_6, %c0_7] : memref<64x32xf32, #tpu.memory_space<vmem>>, vector<64x32xf32>
    %cst_8 = arith.constant dense<0.000000e+00> : vector<8x32xf32>
    %10 = tpu.matmul %8, %9, %cst_8 {dimension_numbers = #tpu.dot_dimension_numbers<[1], [0], [0], [1], [0, 0, 1, 1], [], []>} : vector<8x64xf32>, vector<64x32xf32>, vector<8x32xf32> -> vector<8x32xf32>
    %c0_9 = arith.constant 0 : index
    %c0_10 = arith.constant 0 : index
    %11 = vector.load %arg5[%c0_9, %c0_10] : memref<1x32xf32, #tpu.memory_space<vmem>>, vector<1x32xf32>
    %12 = vector.broadcast %11 : vector<1x32xf32> to vector<8x32xf32>
    %13 = arith.addf %10, %12 : vector<8x32xf32>
    %cst_11 = arith.constant 0.00999999977 : f32
    %14 = vector.broadcast %cst_11 : f32 to vector<8x32xf32>
    %15 = arith.mulf %14, %13 : vector<8x32xf32>
    %16 = arith.maximumf %13, %15 : vector<8x32xf32>
    %c0_12 = arith.constant 0 : index
    %c0_13 = arith.constant 0 : index
    %17 = vector.load %arg6[%c0_12, %c0_13] : memref<32x8xf32, #tpu.memory_space<vmem>>, vector<32x8xf32>
    %cst_14 = arith.constant dense<0.000000e+00> : vector<8x8xf32>
    %18 = tpu.matmul %16, %17, %cst_14 {dimension_numbers = #tpu.dot_dimension_numbers<[1], [0], [0], [1], [0, 0, 1, 1], [], []>} : vector<8x32xf32>, vector<32x8xf32>, vector<8x8xf32> -> vector<8x8xf32>
    %c0_15 = arith.constant 0 : index
    %c0_16 = arith.constant 0 : index
    %19 = vector.load %arg7[%c0_15, %c0_16] : memref<1x8xf32, #tpu.memory_space<vmem>>, vector<1x8xf32>
    %20 = vector.broadcast %19 : vector<1x8xf32> to vector<8x8xf32>
    %21 = arith.addf %18, %20 : vector<8x8xf32>
    %c0_17 = arith.constant 0 : index
    %c0_18 = arith.constant 0 : index
    %22 = vector.load %arg8[%c0_17, %c0_18] : memref<8x8xf32, #tpu.memory_space<vmem>>, vector<8x8xf32>
    tpu.vector_store %arg8[%c0_17, %c0_18], %21 {strides = array<i32>} : memref<8x8xf32, #tpu.memory_space<vmem>>, vector<8x8xf32>,
    return
  }
  func.func @transform_0(%arg0: i32) -> (i32, i32) {
    %c0_i32 = arith.constant 0 : i32
    %c0_i32_0 = arith.constant 0 : i32
    return %arg0, %c0_i32 : i32, i32
  }
  func.func @transform_1(%arg0: i32) -> (i32, i32) {
    %c0_i32 = arith.constant 0 : i32
    %c0_i32_0 = arith.constant 0 : i32
    %c0_i32_1 = arith.constant 0 : i32
    return %c0_i32, %c0_i32_0 : i32, i32
  }
  func.func @transform_2(%arg0: i32) -> (i32, i32) {
    %c0_i32 = arith.constant 0 : i32
    %c0_i32_0 = arith.constant 0 : i32
    %c0_i32_1 = arith.constant 0 : i32
    return %c0_i32, %c0_i32_0 : i32, i32
  }
  func.func @transform_3(%arg0: i32) -> (i32, i32) {
    %c0_i32 = arith.constant 0 : i32
    %c0_i32_0 = arith.constant 0 : i32
    %c0_i32_1 = arith.constant 0 : i32
    return %c0_i32, %c0_i32_0 : i32, i32
  }
  func.func @transform_4(%arg0: i32) -> (i32, i32) {
    %c0_i32 = arith.constant 0 : i32
    %c0_i32_0 = arith.constant 0 : i32
    %c0_i32_1 = arith.constant 0 : i32
    return %c0_i32, %c0_i32_0 : i32, i32
  }
  func.func @transform_5(%arg0: i32) -> (i32, i32) {
    %c0_i32 = arith.constant 0 : i32
    %c0_i32_0 = arith.constant 0 : i32
    %c0_i32_1 = arith.constant 0 : i32
    return %c0_i32, %c0_i32_0 : i32, i32
  }
  func.func @transform_6(%arg0: i32) -> (i32, i32) {
    %c0_i32 = arith.constant 0 : i32
    %c0_i32_0 = arith.constant 0 : i32
    %c0_i32_1 = arith.constant 0 : i32
    return %c0_i32, %c0_i32_0 : i32, i32
  }
  func.func @transform_7(%arg0: i32) -> (i32, i32) {
    %c0_i32 = arith.constant 0 : i32
    %c0_i32_0 = arith.constant 0 : i32
    return %arg0, %c0_i32 : i32, i32
  }
}

</mosaic_0001>

<llo_original>
// kernel: tpu_custom_call.1
$region0: #{tpu_custom_call.1}
  #allocation0 [shape = 'u32[]', space=smem, size = 0x4, offset = 0x4, fixed_abs, tag = 'smem constant byte address 0x4 - core index']
  #allocation1 [shape = 'u32[72,128]{1,0:T(1,128)}', space=vmem, size = 0x9000, scoped, tag = 'internal scratch']
  %s0 = inlined_call_operand.vmem [shape: f32[4,32], index: 0, kind: input, shape index: {}]
  %s1 = inlined_call_operand.vmem [shape: f32[32,64], index: 1, kind: input, shape index: {}]
  %s2 = inlined_call_operand.vmem [shape: f32[1,64], index: 2, kind: input, shape index: {}]
  %s3 = inlined_call_operand.vmem [shape: f32[64,32], index: 3, kind: input, shape index: {}]
  %s4 = inlined_call_operand.vmem [shape: f32[1,32], index: 4, kind: input, shape index: {}]
  %s5 = inlined_call_operand.vmem [shape: f32[32,8], index: 5, kind: input, shape index: {}]
  %s6 = inlined_call_operand.vmem [shape: f32[1,8], index: 6, kind: input, shape index: {}]
  %s7 = inlined_call_operand.hbm [shape: f32[4,8], index: 7, kind: output, shape index: {}]
  %s8 = sld [smem:[#allocation0]]
  $region38: #{tpu_custom_call.1} parent=0
    _
  %s10 = ssub.s32 1, %s8
  %s11 = scalar_select 0, %s10, %s8
  $region1: #{tpu_custom_call.1} parent=0
    #allocation2 [shape = 'u8[4096]{0}', space=vmem, size = 0x1000, scoped, tag = 'output window, operand 0, single buffered']
    #allocation3 [shape = 's32[1]{0}', space=sflag, size = 0x4, scoped, tag = 'scoped memory for tpu_custom_call.1']
    %12 = vsyncpa [#allocation3], 0
    // Predicated region
    $region2: #{tpu_custom_call.1} parent=1 // pred_check
      _
    $region3: #{tpu_custom_call.1} parent=1 // pred_check_branch
      %14 = sbr.rel (0) target = $region5
    $region4: #{tpu_custom_call.1} parent=1 // pred_region
      _
    $region5: #{tpu_custom_call.1} parent=1 // pred_fallthru
      _
    // Predicated region
    $region6: #{tpu_custom_call.1} parent=1 // pred_check
      _
    $region7: #{tpu_custom_call.1} parent=1 // pred_check_branch
      %16 = sbr.rel (0) target = $region9
    $region8: #{tpu_custom_call.1} parent=1 // pred_region
      _
    $region9: #{tpu_custom_call.1} parent=1 // pred_fallthru
      _
    // Predicated region
    $region10: #{tpu_custom_call.1} parent=1 // pred_check
      _
    $region11: #{tpu_custom_call.1} parent=1 // pred_check_branch
      %18 = sbr.rel (0) target = $region13
    $region12: #{tpu_custom_call.1} parent=1 // pred_region
      _
    $region13: #{tpu_custom_call.1} parent=1 // pred_fallthru
      _
    // Predicated region
    $region14: #{tpu_custom_call.1} parent=1 // pred_check
      _
    $region15: #{tpu_custom_call.1} parent=1 // pred_check_branch
      %20 = sbr.rel (0) target = $region17
    $region16: #{tpu_custom_call.1} parent=1 // pred_region
      _
    $region17: #{tpu_custom_call.1} parent=1 // pred_fallthru
      _
    // Predicated region
    $region18: #{tpu_custom_call.1} parent=1 // pred_check
      _
    $region19: #{tpu_custom_call.1} parent=1 // pred_check_branch
      %22 = sbr.rel (0) target = $region21
    $region20: #{tpu_custom_call.1} parent=1 // pred_region
      _
    $region21: #{tpu_custom_call.1} parent=1 // pred_fallthru
      _
    // Predicated region
    $region22: #{tpu_custom_call.1} parent=1 // pred_check
      _
    $region23: #{tpu_custom_call.1} parent=1 // pred_check_branch
      %24 = sbr.rel (0) target = $region25
    $region24: #{tpu_custom_call.1} parent=1 // pred_region
      _
    $region25: #{tpu_custom_call.1} parent=1 // pred_fallthru
      _
    // Predicated region
    $region26: #{tpu_custom_call.1} parent=1 // pred_check
      _
    $region27: #{tpu_custom_call.1} parent=1 // pred_check_branch
      %26 = sbr.rel (0) target = $region29
    $region28: #{tpu_custom_call.1} parent=1 // pred_region
      _
    $region29: #{tpu_custom_call.1} parent=1 // pred_fallthru
      _
    %v27 = vld [vmem:[%s0] sm:$0xff]
    %v28 = vld [vmem:[%s1] sm:$0xff]
    %v29 = vld [vmem:[%s1 + $0x8] sm:$0xff]
    %v30 = vld [vmem:[%s1 + $0x10] sm:$0xff]
    %v31 = vld [vmem:[%s1 + $0x18] sm:$0xff]
    %v32 = vld [vmem:[%s2] sm:$0x1]
    %v34 = vperm.slane %v32, 0
    %vm36 = vcmask 261120
    %v38 = vsel %vm36, %v27, 0
    %40 = vmatpush.msra.mxu0 0.0
    %41 = vmatpush.msra.mxu0 0.0
    %42 = vmatpush.msra.mxu0 0.0
    %43 = vmatpush.msra.mxu0 0.0
    %44 = vmatpush.msra.mxu0 0.0
    %45 = vmatpush.msra.mxu0 0.0
    %46 = vmatpush.msra.mxu0 0.0
    %47 = vmatpush.msra.mxu0 0.0
    %48 = vmatpush.msra.mxu0 0.0
    %49 = vmatpush.msra.mxu0 0.0
    %50 = vmatpush.msra.mxu0 0.0
    %51 = vmatpush.msra.mxu0 0.0
    %52 = vmatpush.msra.mxu0 %v31
    %53 = vmatpush.msra.mxu0 %v30
    %54 = vmatpush.msra.mxu0 %v29
    %55 = vmatpush.msra.mxu0 %v28
    %56 = vmatmul.f32.gmra.mxu0 %v38
    %v57 = vpop.f32.mrf.mxu0
    %v58 = vadd.f32 %v34, %v57
    %59 = vdwg.mxu0
    %v60 = vmul.f32 %v58, 0.01
    %v61 = vmax.f32 %v58, %v60
    %v62 = vld [vmem:[%s3] sm:$0xff]
    %v63 = vld [vmem:[%s3 + $0x8] sm:$0xff]
    %v64 = vld [vmem:[%s3 + $0x10] sm:$0xff]
    %v65 = vld [vmem:[%s3 + $0x18] sm:$0xff]
    %v66 = vld [vmem:[%s3 + $0x20] sm:$0xff]
    %v67 = vld [vmem:[%s3 + $0x28] sm:$0xff]
    %v68 = vld [vmem:[%s3 + $0x30] sm:$0xff]
    %v69 = vld [vmem:[%s3 + $0x38] sm:$0xff]
    %v70 = vld [vmem:[%s4] sm:$0x1]
    %v72 = vperm.slane %v70, 0
    %vm74 = vcmask 523264
    %v76 = vsel %vm74, %v61, 0
    %78 = vmatpush.msra.mxu0 0.0
    %79 = vmatpush.msra.mxu0 0.0
    %80 = vmatpush.msra.mxu0 0.0
    %81 = vmatpush.msra.mxu0 0.0
    %82 = vmatpush.msra.mxu0 0.0
    %83 = vmatpush.msra.mxu0 0.0
    %84 = vmatpush.msra.mxu0 0.0
    %85 = vmatpush.msra.mxu0 0.0
    %86 = vmatpush.msra.mxu0 %v69
    %87 = vmatpush.msra.mxu0 %v68
    %88 = vmatpush.msra.mxu0 %v67
    %89 = vmatpush.msra.mxu0 %v66
    %90 = vmatpush.msra.mxu0 %v65
    %91 = vmatpush.msra.mxu0 %v64
    %92 = vmatpush.msra.mxu0 %v63
    %93 = vmatpush.msra.mxu0 %v62
    %94 = vmatmul.f32.gmra.mxu0 %v76
    %v95 = vpop.f32.mrf.mxu0
    %v96 = vadd.f32 %v72, %v95
    %97 = vdwg.mxu0
    %v98 = vmul.f32 %v96, 0.01
    %v99 = vmax.f32 %v96, %v98
    %v100 = vld [vmem:[%s5] sm:$0xff]
    %v101 = vld [vmem:[%s5 + $0x8] sm:$0xff]
    %v102 = vld [vmem:[%s5 + $0x10] sm:$0xff]
    %v103 = vld [vmem:[%s5 + $0x18] sm:$0xff]
    %v104 = vld [vmem:[%s6] sm:$0x1]
    %v106 = vperm.slane %v104, 0
    %v109 = vsel %vm36, %v99, 0
    %111 = vmatpush.msra.mxu0 0.0
    %112 = vmatpush.msra.mxu0 0.0
    %113 = vmatpush.msra.mxu0 0.0
    %114 = vmatpush.msra.mxu0 0.0
    %115 = vmatpush.msra.mxu0 0.0
    %116 = vmatpush.msra.mxu0 0.0
    %117 = vmatpush.msra.mxu0 0.0
    %118 = vmatpush.msra.mxu0 0.0
    %119 = vmatpush.msra.mxu0 0.0
    %120 = vmatpush.msra.mxu0 0.0
    %121 = vmatpush.msra.mxu0 0.0
    %122 = vmatpush.msra.mxu0 0.0
    %123 = vmatpush.msra.mxu0 %v103
    %124 = vmatpush.msra.mxu0 %v102
    %125 = vmatpush.msra.mxu0 %v101
    %126 = vmatpush.msra.mxu0 %v100
    %127 = vmatmul.f32.gmra.mxu0 %v109
    %v128 = vpop.f32.mrf.mxu0
    %v129 = vadd.f32 %v106, %v128
    %130 = vdwg.mxu0
    %vm131 = vcmask 64512
    %132 = vst.msk [vmem:[#allocation2] sm:$0xff] %vm131, %v129
    // Predicated region
    $region30: #{tpu_custom_call.1} parent=1 // pred_check
      _
    $region31: #{tpu_custom_call.1} parent=1 // pred_check_branch
      %134 = sbr.rel (0) target = $region33
    $region32: #{tpu_custom_call.1} parent=1 // pred_region
      %136 = vsyncadd [#allocation3], 64
      %s137 = sshll.u32 [#allocation2], 4
      %s138 = int_to_ptr.vmem [resolvable:$true] %s137
      %s139 = sshll.u32 %s7, 4
      %s140 = int_to_ptr.hbm [resolvable:$true] %s139
      %145 = dma.vmem_to_hbm [thread:$0]  %s138, 64, %s140, [#allocation3], 64, 64, 4
    $region33: #{tpu_custom_call.1} parent=1 // pred_fallthru
      _
    // Predicated region
    $region34: #{tpu_custom_call.1} parent=1 // pred_check
      _
    $region35: #{tpu_custom_call.1} parent=1 // pred_check_branch
      %147 = sbr.rel (0) target = $region37
    $region36: #{tpu_custom_call.1} parent=1 // pred_region
      %149 = dma.done [#allocation3], 128
    $region37: #{tpu_custom_call.1} parent=1 // pred_fallthru
      _
    %150 = vsyncpa [#allocation3], 1

</llo_original>
